<compile_context>
chip_gen: v7x
topology: tpu7x:2x2x1
jax: 0.10.0
libtpu: 0.0.40
codegen_flags: <defaults>
</compile_context>

<pallas_src>
import jax
import jax.numpy as jnp
from jax.experimental import pallas as pl
from jax.experimental.pallas import tpu as pltpu

LANE = 128  # TPU vreg lane width


def _mlp_kernel(x_ref, w1_ref, b1_ref, w2_ref, b2_ref, out_ref, e_ref):
    # x_ref:  (1, T)   batch on the lane axis
    # w1_ref: (10, 1)  hidden weights (one weight per hidden unit, in_features=1)
    # b1_ref: (10, 1)  hidden bias
    # w2_ref: (10, 1)  output weights (one weight per hidden unit)
    # b2_ref: (1,)     output bias, SMEM scalar
    # out_ref: (1, T)  e_ref: (10, T)
    x = x_ref[...]                                            # (1, T)

    # Hidden layer + ReLU: pure VPU broadcast multiply/add (no MXU).
    e = jnp.maximum(w1_ref[...] * x + b1_ref[...], 0.0)       # (10, T)
    e_ref[...] = e.astype(e_ref.dtype)

    # Dropout: inference identity (see TODO above), then output projection as
    # elementwise multiply + sublane (XLU) reduction over the 10 hidden units.
    y = jnp.sum(w2_ref[...] * e, axis=0, keepdims=True)       # (1, T)
    out_ref[...] = (y + b2_ref[0]).astype(out_ref.dtype)


def net_forward(x, w1, b1, w2, b2, *, tile_n=8192):
    """Forward pass of Net.

    Args:
      x:  (N, 1) float input (PyTorch layout: row = sample).
      w1: (10, 1) hidden.weight (PyTorch [out_features, in_features]).
      b1: (10,)   hidden.bias.
      w2: (1, 10) predict.weight.
      b2: (1,)    predict.bias.
    Returns:
      (out, e) with out: (N, 1), e: (N, 10), matching Net.forward.
    """
    N = x.shape[0]
    assert x.shape == (N, 1)

    # --- lane-dense input layout: batch on the last (lane) axis --------------
    x_t = x.astype(jnp.float32).reshape(1, N)

    # Tile size: multiple of 128, no larger than the (padded) batch.
    tile = max(LANE, (int(tile_n) // LANE) * LANE)
    n_128 = pl.cdiv(N, LANE) * LANE
    tile = min(tile, n_128)
    n_pad = pl.cdiv(N, tile) * tile
    if n_pad != N:
        x_t = jnp.pad(x_t, ((0, 0), (0, n_pad - N)))

    # --- parameters: column vectors over the 10 hidden units -----------------
    w1c = w1.astype(jnp.float32).reshape(10, 1)
    b1c = b1.astype(jnp.float32).reshape(10, 1)
    w2c = w2.astype(jnp.float32).reshape(10, 1)   # (1,10) -> (10,1) column
    b2s = b2.astype(jnp.float32).reshape(1,)      # SMEM scalar

    grid = (n_pad // tile,)

    out_t, e_t = pl.pallas_call(
        _mlp_kernel,
        out_shape=(
            jax.ShapeDtypeStruct((1, n_pad), jnp.float32),   # predict output (lane-dense)
            jax.ShapeDtypeStruct((10, n_pad), jnp.float32),  # embedding e    (lane-dense)
        ),
        grid=grid,
        in_specs=[
            pl.BlockSpec((1, tile), lambda i: (0, i)),        # x (batch-tiled)
            pl.BlockSpec((10, 1), lambda i: (0, 0)),          # w1 (resident)
            pl.BlockSpec((10, 1), lambda i: (0, 0)),          # b1 (resident)
            pl.BlockSpec((10, 1), lambda i: (0, 0)),          # w2 (resident)
            pl.BlockSpec(memory_space=pltpu.MemorySpace.SMEM),  # b2 scalar in SMEM
        ],
        out_specs=(
            pl.BlockSpec((1, tile), lambda i: (0, i)),
            pl.BlockSpec((10, tile), lambda i: (0, i)),
        ),
        compiler_params=pltpu.CompilerParams(
            dimension_semantics=("parallel",),   # batch axis: megacore-shardable (v7x)
        ),
    )(x_t, w1c, b1c, w2c, b2s)

    # Back to the PyTorch row-major layout (callers wanting max throughput can
    # consume the lane-dense (1,N)/(10,N) layout directly and skip this).
    out = out_t[:, :N].T    # (N, 1)
    e = e_t[:, :N].T        # (N, 10)
    return out, e


def _reference(x, w1, b1, w2, b2):
    e = jnp.maximum(x @ w1.T + b1, 0.0)      # (N, 10)
    out = e @ w2.T + b2                      # (N, 1)
    return out, e


if __name__ == "__main__":
    key = jax.random.PRNGKey(0)
    k_x, k_w1, k_b1, k_w2, k_b2, k_x2 = jax.random.split(key, 6)

    # Parameters in PyTorch layout, mimicking nn.Linear's U(-1/sqrt(fan_in), ..) init.
    w1 = jax.random.uniform(k_w1, (10, 1), jnp.float32, -1.0, 1.0)       # fan_in = 1
    b1 = jax.random.uniform(k_b1, (10,), jnp.float32, -1.0, 1.0)
    bound2 = 1.0 / jnp.sqrt(10.0)
    w2 = jax.random.uniform(k_w2, (1, 10), jnp.float32, -bound2, bound2)  # fan_in = 10
    b2 = jax.random.uniform(k_b2, (1,), jnp.float32, -bound2, bound2)

    # Small batch (as in the module's typical use).  NOTE: at this size the call
    # is launch-overhead bound; the kernel is written for large N.
    N = 8
    x = jax.random.normal(k_x, (N, 1), dtype=jnp.float32)
    out, e = net_forward(x, w1, b1, w2, b2)
    jax.block_until_ready((out, e))

    out_ref, e_ref = _reference(x, w1, b1, w2, b2)
    assert out.shape == (N, 1) and e.shape == (N, 10)
    assert jnp.allclose(e, e_ref, atol=1e-5), "embedding mismatch (N=8)"
    assert jnp.allclose(out, out_ref, atol=1e-5), "output mismatch (N=8)"

    # Second check: non-multiple-of-128 batch with a multi-step grid (padding +
    # batch tiling + lane-dense stores all exercised).
    N2 = 300
    x2 = jax.random.normal(k_x2, (N2, 1), dtype=jnp.float32)
    out2, e2 = net_forward(x2, w1, b1, w2, b2, tile_n=128)
    jax.block_until_ready((out2, e2))

    out2_ref, e2_ref = _reference(x2, w1, b1, w2, b2)
    assert out2.shape == (N2, 1) and e2.shape == (N2, 10)
    assert jnp.allclose(e2, e2_ref, atol=1e-5), "embedding mismatch (N=300)"
    assert jnp.allclose(out2, out2_ref, atol=1e-5), "output mismatch (N=300)"

    print("KERNEL_OK")
</pallas_src>

<mosaic_0001>
module attributes {stable_mosaic.version = 11 : i64} {
  func.func @_mlp_kernel(%arg0: i32, %arg1: memref<1x128xf32, #tpu.memory_space<vmem>>, %arg2: memref<10x1xf32, #tpu.memory_space<vmem>>, %arg3: memref<10x1xf32, #tpu.memory_space<vmem>>, %arg4: memref<10x1xf32, #tpu.memory_space<vmem>>, %arg5: memref<1xf32, #tpu.memory_space<smem>>, %arg6: memref<1x128xf32, #tpu.memory_space<vmem>>, %arg7: memref<10x128xf32, #tpu.memory_space<vmem>>) attributes {dimension_semantics = [#tpu.dimension_semantics<parallel>], iteration_bounds = array<i64: 1>, scalar_prefetch = 0 : i64, scratch_operands = 0 : i64, tpu.core_type = #tpu.core_type<tc>, window_params = [{transform_indices = @transform_0, window_bounds = array<i64: 1, 128>}, {pipeline_mode = #tpu.pipeline_mode<synchronous>, transform_indices = @transform_1, window_bounds = array<i64: 10, 1>}, {pipeline_mode = #tpu.pipeline_mode<synchronous>, transform_indices = @transform_2, window_bounds = array<i64: 10, 1>}, {pipeline_mode = #tpu.pipeline_mode<synchronous>, transform_indices = @transform_3, window_bounds = array<i64: 10, 1>}, {transform_indices = @transform_4, window_bounds = array<i64: 1>}, {transform_indices = @transform_5, window_bounds = array<i64: 1, 128>}, {transform_indices = @transform_6, window_bounds = array<i64: 10, 128>}]} {
    %c0 = arith.constant 0 : index
    %c0_0 = arith.constant 0 : index
    %0 = vector.load %arg1[%c0, %c0_0] : memref<1x128xf32, #tpu.memory_space<vmem>>, vector<1x128xf32>
    %c0_1 = arith.constant 0 : index
    %c0_2 = arith.constant 0 : index
    %1 = vector.load %arg2[%c0_1, %c0_2] : memref<10x1xf32, #tpu.memory_space<vmem>>, vector<10x1xf32>
    %2 = vector.broadcast %1 : vector<10x1xf32> to vector<10x128xf32>
    %3 = vector.broadcast %0 : vector<1x128xf32> to vector<10x128xf32>
    %4 = arith.mulf %2, %3 : vector<10x128xf32>
    %c0_3 = arith.constant 0 : index
    %c0_4 = arith.constant 0 : index
    %5 = vector.load %arg3[%c0_3, %c0_4] : memref<10x1xf32, #tpu.memory_space<vmem>>, vector<10x1xf32>
    %6 = vector.broadcast %5 : vector<10x1xf32> to vector<10x128xf32>
    %7 = arith.addf %4, %6 : vector<10x128xf32>
    %cst = arith.constant 0.000000e+00 : f32
    %8 = vector.broadcast %cst : f32 to vector<10x128xf32>
    %9 = arith.maximumf %7, %8 : vector<10x128xf32>
    %c0_5 = arith.constant 0 : index
    %c0_6 = arith.constant 0 : index
    %10 = vector.load %arg7[%c0_5, %c0_6] : memref<10x128xf32, #tpu.memory_space<vmem>>, vector<10x128xf32>
    tpu.vector_store %arg7[%c0_5, %c0_6], %9 {strides = array<i32>} : memref<10x128xf32, #tpu.memory_space<vmem>>, vector<10x128xf32>,
    %c0_7 = arith.constant 0 : index
    %c0_8 = arith.constant 0 : index
    %11 = vector.load %arg4[%c0_7, %c0_8] : memref<10x1xf32, #tpu.memory_space<vmem>>, vector<10x1xf32>
    %12 = vector.broadcast %11 : vector<10x1xf32> to vector<10x128xf32>
    %13 = arith.mulf %12, %9 : vector<10x128xf32>
    %cst_9 = arith.constant dense<0.000000e+00> : vector<128xf32>
    %14 = vector.multi_reduction <add>, %13, %cst_9 [0] : vector<10x128xf32> to vector<128xf32>
    %15 = vector.shape_cast %14 : vector<128xf32> to vector<1x128xf32>
    %c0_10 = arith.constant 0 : index
    %16 = memref.load %arg5[%c0_10] : memref<1xf32, #tpu.memory_space<smem>>
    %17 = vector.broadcast %16 : f32 to vector<1x128xf32>
    %18 = arith.addf %15, %17 : vector<1x128xf32>
    %c0_11 = arith.constant 0 : index
    %c0_12 = arith.constant 0 : index
    %19 = vector.load %arg6[%c0_11, %c0_12] : memref<1x128xf32, #tpu.memory_space<vmem>>, vector<1x128xf32>
    tpu.vector_store %arg6[%c0_11, %c0_12], %18 {strides = array<i32>} : memref<1x128xf32, #tpu.memory_space<vmem>>, vector<1x128xf32>,
    return
  }
  func.func @transform_0(%arg0: i32) -> (i32, i32) {
    %c0_i32 = arith.constant 0 : i32
    %c0_i32_0 = arith.constant 0 : i32
    return %c0_i32, %arg0 : i32, i32
  }
  func.func @transform_1(%arg0: i32) -> (i32, i32) {
    %c0_i32 = arith.constant 0 : i32
    %c0_i32_0 = arith.constant 0 : i32
    %c0_i32_1 = arith.constant 0 : i32
    return %c0_i32, %c0_i32_0 : i32, i32
  }
  func.func @transform_2(%arg0: i32) -> (i32, i32) {
    %c0_i32 = arith.constant 0 : i32
    %c0_i32_0 = arith.constant 0 : i32
    %c0_i32_1 = arith.constant 0 : i32
    return %c0_i32, %c0_i32_0 : i32, i32
  }
  func.func @transform_3(%arg0: i32) -> (i32, i32) {
    %c0_i32 = arith.constant 0 : i32
    %c0_i32_0 = arith.constant 0 : i32
    %c0_i32_1 = arith.constant 0 : i32
    return %c0_i32, %c0_i32_0 : i32, i32
  }
  func.func @transform_4(%arg0: i32) -> i32 {
    %c0_i32 = arith.constant 0 : i32
    %c0_i32_0 = arith.constant 0 : i32
    return %c0_i32 : i32
  }
  func.func @transform_5(%arg0: i32) -> (i32, i32) {
    %c0_i32 = arith.constant 0 : i32
    %c0_i32_0 = arith.constant 0 : i32
    return %c0_i32, %arg0 : i32, i32
  }
  func.func @transform_6(%arg0: i32) -> (i32, i32) {
    %c0_i32 = arith.constant 0 : i32
    %c0_i32_0 = arith.constant 0 : i32
    return %c0_i32, %arg0 : i32, i32
  }
}

</mosaic_0001>

<llo_original>
// kernel: tpu_custom_call.1
$region0: #{tpu_custom_call.1}
  #allocation0 [shape = 'u32[]', space=smem, size = 0x4, offset = 0x4, fixed_abs, tag = 'smem constant byte address 0x4 - core index']
  #allocation1 [shape = 'u32[144,128]{1,0:T(1,128)}', space=vmem, size = 0x12000, scoped, tag = 'internal scratch']
  #allocation2 [shape = 'f32[1]{0:T(128)S(6)}', space=smem, size = 0x200, scoped, tag = 'scoped memory for tpu_custom_call.1']
  %s0 = inlined_call_operand.vmem [shape: f32[1,128], index: 0, kind: input, shape index: {}]
  %s1 = inlined_call_operand.vmem [shape: f32[10,1], index: 1, kind: input, shape index: {}]
  %s2 = inlined_call_operand.vmem [shape: f32[10,1], index: 2, kind: input, shape index: {}]
  %s3 = inlined_call_operand.vmem [shape: f32[10,1], index: 3, kind: input, shape index: {}]
  %s4 = inlined_call_operand.<no memory space> [shape: f32[1], index: 4, kind: input, shape index: {}]
  %s5 = inlined_call_operand.hbm [shape: f32[1,128], index: 5, kind: output, shape index: {0}]
  %s6 = inlined_call_operand.hbm [shape: f32[10,128], index: 6, kind: output, shape index: {1}]
  %7 = xla_tuple %s5, %s6
  %s8 = sld [smem:[#allocation0]]
  $region38: #{tpu_custom_call.1} parent=0
    _
  %s10 = ssub.s32 1, %s8
  %s11 = scalar_select 0, %s10, %s8
  %12 = sst [smem:[#allocation2]] %s4
  $region1: #{tpu_custom_call.1} parent=0
    #allocation3 [shape = 'u8[512]{0}', space=vmem, size = 0x400, scoped, tag = 'output window, operand 0, single buffered']
    #allocation4 [shape = 's32[1]{0}', space=sflag, size = 0x4, scoped, tag = 'scoped memory for tpu_custom_call.1']
    #allocation5 [shape = 'u8[8192]{0}', space=vmem, size = 0x2000, scoped, tag = 'output window, operand 1, single buffered']
    #allocation6 [shape = 's32[1]{0}', space=sflag, size = 0x4, scoped, tag = 'scoped memory for tpu_custom_call.1']
    %13 = vsyncpa [#allocation4], 0
    %14 = vsyncpa [#allocation6], 0
    // Predicated region
    $region2: #{tpu_custom_call.1} parent=1 // pred_check
      _
    $region3: #{tpu_custom_call.1} parent=1 // pred_check_branch
      %16 = sbr.rel (0) target = $region5
    $region4: #{tpu_custom_call.1} parent=1 // pred_region
      _
    $region5: #{tpu_custom_call.1} parent=1 // pred_fallthru
      _
    // Predicated region
    $region6: #{tpu_custom_call.1} parent=1 // pred_check
      _
    $region7: #{tpu_custom_call.1} parent=1 // pred_check_branch
      %18 = sbr.rel (0) target = $region9
    $region8: #{tpu_custom_call.1} parent=1 // pred_region
      _
    $region9: #{tpu_custom_call.1} parent=1 // pred_fallthru
      _
    // Predicated region
    $region10: #{tpu_custom_call.1} parent=1 // pred_check
      _
    $region11: #{tpu_custom_call.1} parent=1 // pred_check_branch
      %20 = sbr.rel (0) target = $region13
    $region12: #{tpu_custom_call.1} parent=1 // pred_region
      _
    $region13: #{tpu_custom_call.1} parent=1 // pred_fallthru
      _
    // Predicated region
    $region14: #{tpu_custom_call.1} parent=1 // pred_check
      _
    $region15: #{tpu_custom_call.1} parent=1 // pred_check_branch
      %22 = sbr.rel (0) target = $region17
    $region16: #{tpu_custom_call.1} parent=1 // pred_region
      _
    $region17: #{tpu_custom_call.1} parent=1 // pred_fallthru
      _
    // Predicated region
    $region18: #{tpu_custom_call.1} parent=1 // pred_check
      _
    $region19: #{tpu_custom_call.1} parent=1 // pred_check_branch
      %24 = sbr.rel (0) target = $region21
    $region20: #{tpu_custom_call.1} parent=1 // pred_region
      _
    $region21: #{tpu_custom_call.1} parent=1 // pred_fallthru
      _
    %v25 = vld [vmem:[%s0] sm:$0x1]
    %v26 = vld [vmem:[%s1] sm:$0xff]
    %v27 = vld [vmem:[%s1 + $0x8] sm:$0x3]
    %29 = vset.pattern.permute.xlu0 0
    %30 = vperm.xlu0 %29, %v26
    %v31 = vpop.permute.xlu0 %30
    %34 = vset.pattern.permute.xlu0 0
    %35 = vperm.xlu0 %34, %v27
    %v36 = vpop.permute.xlu0 %35
    %v39 = vlaneseq
    %v40 = vshrl.u32 %v39, 7
    %v41 = vsub.s32 0, %v40
    %v42 = vrot.slane %v25, %v41
    %v44 = vmul.f32 %v31, %v42
    %v45 = vmul.f32 %v36, %v42
    %v46 = vld [vmem:[%s2] sm:$0xff]
    %v47 = vld [vmem:[%s2 + $0x8] sm:$0x3]
    %49 = vset.pattern.permute.xlu0 0
    %50 = vperm.xlu0 %49, %v46
    %v51 = vpop.permute.xlu0 %50
    %54 = vset.pattern.permute.xlu0 0
    %55 = vperm.xlu0 %54, %v47
    %v56 = vpop.permute.xlu0 %55
    %v58 = vadd.f32 %v44, %v51
    %v59 = vadd.f32 %v45, %v56
    %v60 = vmax.f32 %v58, 0.0
    %v61 = vmax.f32 %v59, 0.0
    %62 = vst [vmem:[#allocation5] sm:$0xff] %v60
    %63 = vst [vmem:[#allocation5 + $0x8] sm:$0x3] %v61
    %v64 = vld [vmem:[%s3] sm:$0xff]
    %v65 = vld [vmem:[%s3 + $0x8] sm:$0x3]
    %67 = vset.pattern.permute.xlu0 0
    %68 = vperm.xlu0 %67, %v64
    %v69 = vpop.permute.xlu0 %68
    %72 = vset.pattern.permute.xlu0 0
    %73 = vperm.xlu0 %72, %v65
    %v74 = vpop.permute.xlu0 %73
    %v76 = vmul.f32 %v69, %v60
    %v77 = vmul.f32 %v74, %v61
    %vm78 = vcmask 1041408
    %v79 = vsel %vm78, %v77, 0.0
    %v80 = vadd.f32 %v76, %v79
    %v81 = vrot.slane %v80, 4
    %v82 = vadd.f32 %v80, %v81
    %v83 = vrot.slane %v82, 2
    %v84 = vadd.f32 %v82, %v83
    %v85 = vrot.slane %v84, 1
    %v86 = vadd.f32 %v84, %v85
    %s87 = sld [smem:[#allocation2]]
    %v88 = vstv %s87
    %v89 = vadd.f32 %v86, %v88
    %90 = vst [vmem:[#allocation3] sm:$0x1] %v89
    // Predicated region
    $region22: #{tpu_custom_call.1} parent=1 // pred_check
      _
    $region23: #{tpu_custom_call.1} parent=1 // pred_check_branch
      %92 = sbr.rel (0) target = $region25
    $region24: #{tpu_custom_call.1} parent=1 // pred_region
      %s94 = ssub.s32 16, 16
      %95 = vsyncadd [#allocation4], %s94
      %s97 = sshll.u32 [#allocation3], 4
      %s98 = int_to_ptr.vmem [resolvable:$true] %s97
      %100 = dma.vmem_to_hbm [thread:$0]  %s98, 16, %s5, [#allocation4]
    $region25: #{tpu_custom_call.1} parent=1 // pred_fallthru
      _
    // Predicated region
    $region26: #{tpu_custom_call.1} parent=1 // pred_check
      _
    $region27: #{tpu_custom_call.1} parent=1 // pred_check_branch
      %102 = sbr.rel (0) target = $region29
    $region28: #{tpu_custom_call.1} parent=1 // pred_region
      %s104 = ssub.s32 256, 256
      %105 = vsyncadd [#allocation6], %s104
      %s106 = sshll.u32 [#allocation5], 4
      %s107 = int_to_ptr.vmem [resolvable:$true] %s106
      %112 = dma.vmem_to_hbm [thread:$0]  %s107, 256, %s6, [#allocation6], 128, 128, 8
    $region29: #{tpu_custom_call.1} parent=1 // pred_fallthru
      _
    // Predicated region
    $region30: #{tpu_custom_call.1} parent=1 // pred_check
      _
    $region31: #{tpu_custom_call.1} parent=1 // pred_check_branch
      %114 = sbr.rel (0) target = $region33
    $region32: #{tpu_custom_call.1} parent=1 // pred_region
      %115 = dma.done [#allocation4], 16
    $region33: #{tpu_custom_call.1} parent=1 // pred_fallthru
      _
    // Predicated region
    $region34: #{tpu_custom_call.1} parent=1 // pred_check
      _
    $region35: #{tpu_custom_call.1} parent=1 // pred_check_branch
      %117 = sbr.rel (0) target = $region37
    $region36: #{tpu_custom_call.1} parent=1 // pred_region
      %118 = dma.done [#allocation6], 256
    $region37: #{tpu_custom_call.1} parent=1 // pred_fallthru
      _
    %119 = vsyncpa [#allocation4], 1
    %120 = vsyncpa [#allocation6], 1

</llo_original>
